<compile_context>
chip_gen: v7x
topology: tpu7x:2x2x1
jax: 0.10.0
libtpu: 0.0.40
codegen_flags: <defaults>
</compile_context>

<pallas_src>
import functools

import jax
import jax.numpy as jnp
import numpy as np
from jax import lax
from jax.experimental import pallas as pl
from jax.experimental.pallas import tpu as pltpu


# ----------------------------- Pallas kernel --------------------------------
def _fsmn_kernel(*refs, Bt, Tt, W, Lh, T, left_frame, right_frame,
                 left_dilation, right_dilation, has_hidden):
    it = iter(refs)
    x_ref = next(it)                                   # (Bt, 1, W, Din)  bf16
    hid_ref = next(it) if has_hidden else None         # (Bt, H, Tt)      f32
    w_in_ref = next(it)                                # (H, Din)         bf16
    b_in_ref = next(it)                                # (H, 1)           f32
    w_l_ref = next(it) if left_frame > 0 else None     # (H, lf+1)        f32
    w_r_ref = next(it) if right_frame > 0 else None    # (H, rf)          f32
    w_out_ref = next(it)                               # (H, Dout)        bf16
    b_out_ref = next(it)                               # (1, Dout)        f32
    out_ref = next(it)                                 # (Bt, Tt, Dout)   f32
    pout_ref = next(it)                                # (Bt, H, Tt)      f32

    t = pl.program_id(1)
    # Absolute frame index of every column of the extended (halo) window.
    pos = t * Tt - Lh + lax.broadcasted_iota(jnp.int32, (1, W), 1)
    valid = jnp.logical_and(pos >= 0, pos < T)          # (1, W)

    # Hoist weight loads (and the boundary-masked bias) out of the batch loop.
    w_in = w_in_ref[...]
    # Padded x rows are exactly zero, so their matmul contribution is 0; only
    # the bias must be zeroed outside the true sequence to reproduce the
    # ConstantPad1d zero padding of p_in (incl. the ragged tail).
    bias_m = jnp.where(valid, b_in_ref[...], 0.0)       # (H, W)
    wl = w_l_ref[...] if left_frame > 0 else None       # wl[:, lf] carries +1
    wr = w_r_ref[...] if right_frame > 0 else None
    w_out = w_out_ref[...]
    b_out = b_out_ref[...]

    for b in range(Bt):
        xb = x_ref[b, 0]                                # (W, Din) bf16

        # conv_in (1x1) on the MXU: bf16 operands, f32 accumulation.
        # einsum('hd,wd->hw')  (rhs-transposed "A @ B^T" form).
        p_ext = lax.dot_general(w_in, xb, (((1,), (1,)), ((), ())),
                                preferred_element_type=jnp.float32)   # (H, W)
        p_ext = p_ext + bias_m

        # identity term (p_in) + depthwise FIR memory taps, all as static
        # slices of the halo-extended window (no concat/zeros buffers).
        if left_frame > 0:
            # zero-shift tap: its weight already includes the +1 identity fold.
            acc = p_ext[:, Lh:Lh + Tt] * wl[:, left_frame:left_frame + 1]
            for k in range(left_frame):
                s = (left_frame - k) * left_dilation
                acc = acc + p_ext[:, Lh - s:Lh - s + Tt] * wl[:, k:k + 1]
        else:
            acc = p_ext[:, Lh:Lh + Tt]
        if right_frame > 0:
            for k in range(right_frame):
                s = (k + 1) * right_dilation
                acc = acc + p_ext[:, Lh + s:Lh + s + Tt] * wr[:, k:k + 1]
        if has_hidden:
            acc = acc + hid_ref[b]                      # hidden is (H, Tt)

        # p_out already in PyTorch (hidden_dim, T) layout -> lane-dense store.
        pout_ref[b] = acc.astype(pout_ref.dtype)

        # conv_out (1x1) on the MXU + ReLU: einsum('ht,ho->to')
        # (lhs-transposed "A^T @ B" form), bf16 operands, f32 accumulate.
        out = lax.dot_general(acc.astype(jnp.bfloat16), w_out,
                              (((0,), (0,)), ((), ())),
                              preferred_element_type=jnp.float32)     # (Tt, Dout)
        out_ref[b] = jnp.maximum(out + b_out, 0.0).astype(out_ref.dtype)


# ------------------------------ wrapper --------------------------------------
def fsmn_forward(x, params, *, left_frame, right_frame, left_dilation,
                 right_dilation, hidden=None, time_tile=128, batch_tile=1):
    """x: (B, T, input_dim) f32; hidden (optional): (B, hidden_dim, T) f32.
    Returns (out, p_out) matching PyTorch: out (B, T, out_dim),
    p_out (B, hidden_dim, T)."""
    w_in, b_in, w_left, w_right, w_out, b_out = params
    B, T, Din = x.shape
    H = w_in.shape[1]
    Dout = w_out.shape[1]
    Lh = left_frame * left_dilation
    Rh = right_frame * right_dilation

    Bt = batch_tile
    Tt = time_tile
    assert B % Bt == 0, "batch_tile must divide batch"
    assert Tt % 8 == 0
    nT = pl.cdiv(T, Tt)
    # lane-dense p_out / hidden blocks need Tt % 128 == 0 unless a single tile
    # covers the whole (padded) sequence.
    assert Tt % 128 == 0 or nT == 1
    T_pad = nT * Tt
    W = Tt + Lh + Rh
    nB = B // Bt
    has_hidden = hidden is not None

    # ---- halo'd x windows (built once, in bf16 to halve gather/DMA bytes;
    #      handles true-boundary zero padding, interior halos, ragged tail) ---
    x_pad = jnp.pad(x.astype(jnp.bfloat16),
                    ((0, 0), (Lh, (T_pad - T) + Rh), (0, 0)))
    win = jnp.arange(nT)[:, None] * Tt + jnp.arange(W)[None, :]       # (nT, W)
    x_ext = jnp.take(x_pad, win, axis=1)                        # (B,nT,W,Din)

    # ---- weights in kernel-friendly layouts (tiny one-time relayouts) -------
    w_in_t = jnp.transpose(w_in).astype(jnp.bfloat16)                 # (H, Din)
    b_in_c = jnp.transpose(b_in).astype(jnp.float32)                  # (H, 1)
    if left_frame > 0:
        w_l_t = jnp.transpose(w_left).astype(jnp.float32)             # (H, lf+1)
        # fold the identity (p_in) term into the zero-shift tap weight.
        w_l_t = w_l_t.at[:, left_frame].add(1.0)
    else:
        w_l_t = None
    w_r_t = (jnp.transpose(w_right).astype(jnp.float32)
             if right_frame > 0 else None)                            # (H, rf)
    w_out_bf = w_out.astype(jnp.bfloat16)                             # (H, Dout)
    b_out_r = b_out.astype(jnp.float32)                               # (1, Dout)

    if has_hidden:
        hid_p = jnp.pad(hidden.astype(jnp.float32),
                        ((0, 0), (0, 0), (0, T_pad - T)))             # (B,H,Tp)

    full2 = lambda a: pl.BlockSpec(a.shape, lambda b, t: (0, 0))

    ops, specs = [], []
    ops.append(x_ext)
    specs.append(pl.BlockSpec((Bt, 1, W, Din), lambda b, t: (b, t, 0, 0)))
    if has_hidden:
        ops.append(hid_p)
        specs.append(pl.BlockSpec((Bt, H, Tt), lambda b, t: (b, 0, t)))
    ops.append(w_in_t);  specs.append(full2(w_in_t))
    ops.append(b_in_c);  specs.append(full2(b_in_c))
    if left_frame > 0:
        ops.append(w_l_t);  specs.append(full2(w_l_t))
    if right_frame > 0:
        ops.append(w_r_t);  specs.append(full2(w_r_t))
    ops.append(w_out_bf); specs.append(full2(w_out_bf))
    ops.append(b_out_r);  specs.append(full2(b_out_r))

    kernel = functools.partial(
        _fsmn_kernel, Bt=Bt, Tt=Tt, W=W, Lh=Lh, T=T,
        left_frame=left_frame, right_frame=right_frame,
        left_dilation=left_dilation, right_dilation=right_dilation,
        has_hidden=has_hidden)

    flops = int(2 * B * nT * W * Din * H + 2 * B * T_pad * H * Dout
                + 2 * B * T_pad * H * (left_frame + right_frame + 2))
    bytes_accessed = int(
        x_ext.size * x_ext.dtype.itemsize
        + (B * H * T_pad * 4 if has_hidden else 0)
        + B * T_pad * Dout * 4 + B * H * T_pad * 4
        + (w_in_t.size + w_out_bf.size) * 2
        + (H * (left_frame + 1 + right_frame) + H + Dout) * 4)

    out_pad, pout_pad = pl.pallas_call(
        kernel,
        out_shape=(jax.ShapeDtypeStruct((B, T_pad, Dout), jnp.float32),
                   jax.ShapeDtypeStruct((B, H, T_pad), jnp.float32)),
        grid_spec=pltpu.PrefetchScalarGridSpec(
            num_scalar_prefetch=0,
            grid=(nB, nT),
            in_specs=specs,
            out_specs=[pl.BlockSpec((Bt, Tt, Dout), lambda b, t: (b, t, 0)),
                       pl.BlockSpec((Bt, H, Tt), lambda b, t: (b, 0, t))],
        ),
        compiler_params=pltpu.CompilerParams(
            dimension_semantics=("parallel", "parallel"),
            vmem_limit_bytes=32 * 1024 * 1024),
        cost_estimate=pl.CostEstimate(flops=flops, transcendentals=0,
                                      bytes_accessed=bytes_accessed),
    )(*ops)

    out = out_pad[:, :T, :] if T_pad != T else out_pad
    p_out = pout_pad[:, :, :T] if T_pad != T else pout_pad
    return out, p_out


# --------------------------- pure-JAX reference -------------------------------
def fsmn_reference(x, params, *, left_frame, right_frame, left_dilation,
                   right_dilation, hidden=None):
    w_in, b_in, w_left, w_right, w_out, b_out = params
    T = x.shape[1]
    p_in = jnp.einsum("btd,dh->bth", x, w_in) + b_in[0]
    p_out = p_in
    for k in range(left_frame + 1):
        s = (left_frame - k) * left_dilation
        shifted = p_in if s == 0 else jnp.pad(
            p_in, ((0, 0), (s, 0), (0, 0)))[:, :T]
        p_out = p_out + shifted * w_left[k][None, None, :]
    for k in range(right_frame):
        s = (k + 1) * right_dilation
        shifted = jnp.pad(p_in, ((0, 0), (0, s), (0, 0)))[:, s:]
        p_out = p_out + shifted * w_right[k][None, None, :]
    if hidden is not None:
        p_out = p_out + jnp.transpose(hidden, (0, 2, 1))
    out = jax.nn.relu(jnp.einsum("bth,ho->bto", p_out, w_out) + b_out[0])
    return out, jnp.transpose(p_out, (0, 2, 1))


# --------------------------------- main ---------------------------------------
if __name__ == "__main__":
    # module config (small, consistent with FsmnLayer.__init__)
    input_dim, out_dim, hidden_dim = 24, 40, 32
    left_frame, right_frame = 2, 2
    left_dilation, right_dilation = 2, 1
    # T > 128 so the 128-frame time tiling, FIR halos at the interior tile
    # seam, and the ragged-tail masking are all exercised (arrays still tiny).
    B, T = 2, 250

    key = jax.random.PRNGKey(0)
    ks = jax.random.split(key, 8)

    # Synthetic parameters (layout correspondence to the PyTorch module):
    #   conv_in.weight  (H, Din, 1)  -> stored as (Din, H)
    #   conv_left.weight (H, 1, L+1) -> stored as (L+1, H)
    #   conv_right.weight (H, 1, R)  -> stored as (R, H)
    #   conv_out.weight (Dout, H, 1) -> stored as (H, Dout)
    w_in = jax.random.normal(ks[0], (input_dim, hidden_dim), jnp.float32) * 0.1
    b_in = jax.random.normal(ks[1], (1, hidden_dim), jnp.float32) * 0.1
    w_left = jax.random.normal(ks[2], (left_frame + 1, hidden_dim),
                               jnp.float32) * 0.1
    w_right = jax.random.normal(ks[3], (right_frame, hidden_dim),
                                jnp.float32) * 0.1
    w_out = jax.random.normal(ks[4], (hidden_dim, out_dim), jnp.float32) * 0.1
    b_out = jax.random.normal(ks[5], (1, out_dim), jnp.float32) * 0.1
    params = (w_in, b_in, w_left, w_right, w_out, b_out)

    x = jax.random.normal(ks[6], (B, T, input_dim), jnp.float32)
    hidden = jax.random.normal(ks[7], (B, hidden_dim, T), jnp.float32) * 0.1

    cfg = dict(left_frame=left_frame, right_frame=right_frame,
               left_dilation=left_dilation, right_dilation=right_dilation)

    # run 1: hidden=None (specialized kernel, no zero tensor), 1 batch row/step
    out1, p1 = fsmn_forward(x, params, **cfg, hidden=None,
                            time_tile=128, batch_tile=1)
    out1 = jax.block_until_ready(out1)
    p1 = jax.block_until_ready(p1)
    r_out1, r_p1 = fsmn_reference(x, params, **cfg, hidden=None)
    np.testing.assert_allclose(np.asarray(out1), np.asarray(r_out1),
                               atol=2e-2, rtol=2e-2)
    np.testing.assert_allclose(np.asarray(p1), np.asarray(r_p1),
                               atol=2e-2, rtol=2e-2)

    # run 2: with the hidden residual and 2 batch rows per grid step
    out2, p2 = fsmn_forward(x, params, **cfg, hidden=hidden,
                            time_tile=128, batch_tile=2)
    out2 = jax.block_until_ready(out2)
    p2 = jax.block_until_ready(p2)
    r_out2, r_p2 = fsmn_reference(x, params, **cfg, hidden=hidden)
    np.testing.assert_allclose(np.asarray(out2), np.asarray(r_out2),
                               atol=2e-2, rtol=2e-2)
    np.testing.assert_allclose(np.asarray(p2), np.asarray(r_p2),
                               atol=2e-2, rtol=2e-2)

    assert out1.shape == (B, T, out_dim)
    assert p1.shape == (B, hidden_dim, T)
    print("KERNEL_OK")
</pallas_src>

<mosaic_0001>
module attributes {stable_mosaic.version = 11 : i64} {
  func.func @_fsmn_kernel(%arg0: i32, %arg1: i32, %arg2: memref<1x1x134x24xbf16, #tpu.memory_space<vmem>>, %arg3: memref<32x24xbf16, #tpu.memory_space<vmem>>, %arg4: memref<32x1xf32, #tpu.memory_space<vmem>>, %arg5: memref<32x3xf32, #tpu.memory_space<vmem>>, %arg6: memref<32x2xf32, #tpu.memory_space<vmem>>, %arg7: memref<32x40xbf16, #tpu.memory_space<vmem>>, %arg8: memref<1x40xf32, #tpu.memory_space<vmem>>, %arg9: memref<1x128x40xf32, #tpu.memory_space<vmem>>, %arg10: memref<1x32x128xf32, #tpu.memory_space<vmem>>) attributes {dimension_semantics = [#tpu.dimension_semantics<parallel>, #tpu.dimension_semantics<parallel>], iteration_bounds = array<i64: 2, 2>, scalar_prefetch = 0 : i64, scratch_operands = 0 : i64, tpu.core_type = #tpu.core_type<tc>, window_params = [{transform_indices = @transform_0, window_bounds = array<i64: 1, 1, 134, 24>}, {pipeline_mode = #tpu.pipeline_mode<synchronous>, transform_indices = @transform_1, window_bounds = array<i64: 32, 24>}, {pipeline_mode = #tpu.pipeline_mode<synchronous>, transform_indices = @transform_2, window_bounds = array<i64: 32, 1>}, {pipeline_mode = #tpu.pipeline_mode<synchronous>, transform_indices = @transform_3, window_bounds = array<i64: 32, 3>}, {pipeline_mode = #tpu.pipeline_mode<synchronous>, transform_indices = @transform_4, window_bounds = array<i64: 32, 2>}, {pipeline_mode = #tpu.pipeline_mode<synchronous>, transform_indices = @transform_5, window_bounds = array<i64: 32, 40>}, {pipeline_mode = #tpu.pipeline_mode<synchronous>, transform_indices = @transform_6, window_bounds = array<i64: 1, 40>}, {transform_indices = @transform_7, window_bounds = array<i64: 1, 128, 40>}, {transform_indices = @transform_8, window_bounds = array<i64: 1, 32, 128>}]} {
    %c128_i32 = arith.constant 128 : i32
    %0 = arith.muli %arg1, %c128_i32 : i32
    %c4_i32 = arith.constant 4 : i32
    %1 = arith.subi %0, %c4_i32 : i32
    %2 = tpu.iota {dimensions = array<i32: 1>} : vector<1x134xi32>
    %3 = vector.broadcast %1 : i32 to vector<1x134xi32>
    %4 = arith.addi %3, %2 : vector<1x134xi32>
    %c0_i32 = arith.constant 0 : i32
    %5 = vector.broadcast %c0_i32 : i32 to vector<1x134xi32>
    %6 = arith.cmpi sge, %4, %5 : vector<1x134xi32>
    %c250_i32 = arith.constant 250 : i32
    %7 = vector.broadcast %c250_i32 : i32 to vector<1x134xi32>
    %8 = arith.cmpi slt, %4, %7 : vector<1x134xi32>
    %9 = arith.andi %6, %8 : vector<1x134xi1>
    %c0 = arith.constant 0 : index
    %c0_0 = arith.constant 0 : index
    %10 = vector.load %arg3[%c0, %c0_0] : memref<32x24xbf16, #tpu.memory_space<vmem>>, vector<32x24xbf16>
    %c0_1 = arith.constant 0 : index
    %c0_2 = arith.constant 0 : index
    %11 = vector.load %arg4[%c0_1, %c0_2] : memref<32x1xf32, #tpu.memory_space<vmem>>, vector<32x1xf32>
    %cst = arith.constant 0.000000e+00 : f32
    %12 = vector.shape_cast %9 : vector<1x134xi1> to vector<1x134xi1>
    %13 = vector.broadcast %12 : vector<1x134xi1> to vector<32x134xi1>
    %14 = vector.shape_cast %11 : vector<32x1xf32> to vector<32x1xf32>
    %15 = vector.broadcast %14 : vector<32x1xf32> to vector<32x134xf32>
    %16 = vector.broadcast %cst : f32 to vector<32x134xf32>
    %17 = arith.select %13, %15, %16 : vector<32x134xi1>, vector<32x134xf32>
    %c0_3 = arith.constant 0 : index
    %c0_4 = arith.constant 0 : index
    %18 = vector.load %arg5[%c0_3, %c0_4] : memref<32x3xf32, #tpu.memory_space<vmem>>, vector<32x3xf32>
    %c0_5 = arith.constant 0 : index
    %c0_6 = arith.constant 0 : index
    %19 = vector.load %arg6[%c0_5, %c0_6] : memref<32x2xf32, #tpu.memory_space<vmem>>, vector<32x2xf32>
    %c0_7 = arith.constant 0 : index
    %c0_8 = arith.constant 0 : index
    %20 = vector.load %arg7[%c0_7, %c0_8] : memref<32x40xbf16, #tpu.memory_space<vmem>>, vector<32x40xbf16>
    %c0_9 = arith.constant 0 : index
    %c0_10 = arith.constant 0 : index
    %21 = vector.load %arg8[%c0_9, %c0_10] : memref<1x40xf32, #tpu.memory_space<vmem>>, vector<1x40xf32>
    %c0_11 = arith.constant 0 : index
    %c0_12 = arith.constant 0 : index
    %c0_13 = arith.constant 0 : index
    %c0_14 = arith.constant 0 : index
    %22 = vector.load %arg2[%c0_11, %c0_12, %c0_13, %c0_14] : memref<1x1x134x24xbf16, #tpu.memory_space<vmem>>, vector<1x1x134x24xbf16>
    %23 = vector.shape_cast %22 : vector<1x1x134x24xbf16> to vector<134x24xbf16>
    %cst_15 = arith.constant dense<0.000000e+00> : vector<32x134xf32>
    %24 = tpu.matmul %10, %23, %cst_15 {dimension_numbers = #tpu.dot_dimension_numbers<[1], [1], [0], [0], [0, 0, 1, 0], [], []>} : vector<32x24xbf16>, vector<134x24xbf16>, vector<32x134xf32> -> vector<32x134xf32>
    %25 = arith.addf %24, %17 : vector<32x134xf32>
    %26 = vector.extract_strided_slice %25 {offsets = [0, 4], sizes = [32, 128], strides = [1, 1]} : vector<32x134xf32> to vector<32x128xf32>
    %27 = vector.extract_strided_slice %18 {offsets = [0, 2], sizes = [32, 1], strides = [1, 1]} : vector<32x3xf32> to vector<32x1xf32>
    %28 = vector.broadcast %27 : vector<32x1xf32> to vector<32x128xf32>
    %29 = arith.mulf %26, %28 : vector<32x128xf32>
    %30 = vector.extract_strided_slice %25 {offsets = [0, 0], sizes = [32, 128], strides = [1, 1]} : vector<32x134xf32> to vector<32x128xf32>
    %31 = vector.extract_strided_slice %18 {offsets = [0, 0], sizes = [32, 1], strides = [1, 1]} : vector<32x3xf32> to vector<32x1xf32>
    %32 = vector.broadcast %31 : vector<32x1xf32> to vector<32x128xf32>
    %33 = arith.mulf %30, %32 : vector<32x128xf32>
    %34 = arith.addf %29, %33 : vector<32x128xf32>
    %35 = vector.extract_strided_slice %25 {offsets = [0, 2], sizes = [32, 128], strides = [1, 1]} : vector<32x134xf32> to vector<32x128xf32>
    %36 = vector.extract_strided_slice %18 {offsets = [0, 1], sizes = [32, 1], strides = [1, 1]} : vector<32x3xf32> to vector<32x1xf32>
    %37 = vector.broadcast %36 : vector<32x1xf32> to vector<32x128xf32>
    %38 = arith.mulf %35, %37 : vector<32x128xf32>
    %39 = arith.addf %34, %38 : vector<32x128xf32>
    %40 = vector.extract_strided_slice %25 {offsets = [0, 5], sizes = [32, 128], strides = [1, 1]} : vector<32x134xf32> to vector<32x128xf32>
    %41 = vector.extract_strided_slice %19 {offsets = [0, 0], sizes = [32, 1], strides = [1, 1]} : vector<32x2xf32> to vector<32x1xf32>
    %42 = vector.broadcast %41 : vector<32x1xf32> to vector<32x128xf32>
    %43 = arith.mulf %40, %42 : vector<32x128xf32>
    %44 = arith.addf %39, %43 : vector<32x128xf32>
    %45 = vector.extract_strided_slice %25 {offsets = [0, 6], sizes = [32, 128], strides = [1, 1]} : vector<32x134xf32> to vector<32x128xf32>
    %46 = vector.extract_strided_slice %19 {offsets = [0, 1], sizes = [32, 1], strides = [1, 1]} : vector<32x2xf32> to vector<32x1xf32>
    %47 = vector.broadcast %46 : vector<32x1xf32> to vector<32x128xf32>
    %48 = arith.mulf %45, %47 : vector<32x128xf32>
    %49 = arith.addf %44, %48 : vector<32x128xf32>
    %c0_16 = arith.constant 0 : index
    %c0_17 = arith.constant 0 : index
    %c0_18 = arith.constant 0 : index
    %50 = vector.load %arg10[%c0_16, %c0_17, %c0_18] : memref<1x32x128xf32, #tpu.memory_space<vmem>>, vector<1x32x128xf32>
    %51 = vector.shape_cast %50 : vector<1x32x128xf32> to vector<32x128xf32>
    %52 = vector.shape_cast %49 : vector<32x128xf32> to vector<1x32x128xf32>
    tpu.vector_store %arg10[%c0_16, %c0_17, %c0_18], %52 {strides = array<i32>} : memref<1x32x128xf32, #tpu.memory_space<vmem>>, vector<1x32x128xf32>,
    %53 = arith.truncf %49 : vector<32x128xf32> to vector<32x128xbf16>
    %cst_19 = arith.constant dense<0.000000e+00> : vector<128x40xf32>
    %54 = tpu.matmul %53, %20, %cst_19 {dimension_numbers = #tpu.dot_dimension_numbers<[0], [0], [1], [1], [0, 1, 1, 1], [], []>} : vector<32x128xbf16>, vector<32x40xbf16>, vector<128x40xf32> -> vector<128x40xf32>
    %55 = vector.broadcast %21 : vector<1x40xf32> to vector<128x40xf32>
    %56 = arith.addf %54, %55 : vector<128x40xf32>
    %cst_20 = arith.constant 0.000000e+00 : f32
    %57 = vector.broadcast %cst_20 : f32 to vector<128x40xf32>
    %58 = arith.maximumf %56, %57 : vector<128x40xf32>
    %c0_21 = arith.constant 0 : index
    %c0_22 = arith.constant 0 : index
    %c0_23 = arith.constant 0 : index
    %59 = vector.load %arg9[%c0_21, %c0_22, %c0_23] : memref<1x128x40xf32, #tpu.memory_space<vmem>>, vector<1x128x40xf32>
    %60 = vector.shape_cast %59 : vector<1x128x40xf32> to vector<128x40xf32>
    %61 = vector.shape_cast %58 : vector<128x40xf32> to vector<1x128x40xf32>
    tpu.vector_store %arg9[%c0_21, %c0_22, %c0_23], %61 {strides = array<i32>} : memref<1x128x40xf32, #tpu.memory_space<vmem>>, vector<1x128x40xf32>,
    return
  }
  func.func @transform_0(%arg0: i32, %arg1: i32) -> (i32, i32, i32, i32) {
    %c0_i32 = arith.constant 0 : i32
    %c0_i32_0 = arith.constant 0 : i32
    %c0_i32_1 = arith.constant 0 : i32
    return %arg0, %arg1, %c0_i32, %c0_i32_0 : i32, i32, i32, i32
  }
  func.func @transform_1(%arg0: i32, %arg1: i32) -> (i32, i32) {
    %c0_i32 = arith.constant 0 : i32
    %c0_i32_0 = arith.constant 0 : i32
    %c0_i32_1 = arith.constant 0 : i32
    return %c0_i32, %c0_i32_0 : i32, i32
  }
  func.func @transform_2(%arg0: i32, %arg1: i32) -> (i32, i32) {
    %c0_i32 = arith.constant 0 : i32
    %c0_i32_0 = arith.constant 0 : i32
    %c0_i32_1 = arith.constant 0 : i32
    return %c0_i32, %c0_i32_0 : i32, i32
  }
  func.func @transform_3(%arg0: i32, %arg1: i32) -> (i32, i32) {
    %c0_i32 = arith.constant 0 : i32
    %c0_i32_0 = arith.constant 0 : i32
    %c0_i32_1 = arith.constant 0 : i32
    return %c0_i32, %c0_i32_0 : i32, i32
  }
  func.func @transform_4(%arg0: i32, %arg1: i32) -> (i32, i32) {
    %c0_i32 = arith.constant 0 : i32
    %c0_i32_0 = arith.constant 0 : i32
    %c0_i32_1 = arith.constant 0 : i32
    return %c0_i32, %c0_i32_0 : i32, i32
  }
  func.func @transform_5(%arg0: i32, %arg1: i32) -> (i32, i32) {
    %c0_i32 = arith.constant 0 : i32
    %c0_i32_0 = arith.constant 0 : i32
    %c0_i32_1 = arith.constant 0 : i32
    return %c0_i32, %c0_i32_0 : i32, i32
  }
  func.func @transform_6(%arg0: i32, %arg1: i32) -> (i32, i32) {
    %c0_i32 = arith.constant 0 : i32
    %c0_i32_0 = arith.constant 0 : i32
    %c0_i32_1 = arith.constant 0 : i32
    return %c0_i32, %c0_i32_0 : i32, i32
  }
  func.func @transform_7(%arg0: i32, %arg1: i32) -> (i32, i32, i32) {
    %c0_i32 = arith.constant 0 : i32
    %c0_i32_0 = arith.constant 0 : i32
    return %arg0, %arg1, %c0_i32 : i32, i32, i32
  }
  func.func @transform_8(%arg0: i32, %arg1: i32) -> (i32, i32, i32) {
    %c0_i32 = arith.constant 0 : i32
    %c0_i32_0 = arith.constant 0 : i32
    return %arg0, %c0_i32, %arg1 : i32, i32, i32
  }
}

</mosaic_0001>

<llo_original>
// kernel: tpu_custom_call.1
$region0: #{tpu_custom_call.1}
  #allocation0 [shape = 'u32[]', space=smem, size = 0x4, offset = 0x4, fixed_abs, tag = 'smem constant byte address 0x4 - core index']
  #allocation1 [shape = 'u32[144,128]{1,0:T(1,128)}', space=vmem, size = 0x12000, scoped, tag = 'internal scratch']
  %s0 = inlined_call_operand.vmem [shape: bf16[2,2,134,24], index: 0, kind: input, shape index: {}]
  %s1 = inlined_call_operand.vmem [shape: bf16[32,24], index: 1, kind: input, shape index: {}]
  %s2 = inlined_call_operand.vmem [shape: f32[32,1], index: 2, kind: input, shape index: {}]
  %s3 = inlined_call_operand.vmem [shape: f32[32,3], index: 3, kind: input, shape index: {}]
  %s4 = inlined_call_operand.vmem [shape: f32[32,2], index: 4, kind: input, shape index: {}]
  %s5 = inlined_call_operand.vmem [shape: bf16[32,40], index: 5, kind: input, shape index: {}]
  %s6 = inlined_call_operand.vmem [shape: f32[1,40], index: 6, kind: input, shape index: {}]
  %s7 = inlined_call_operand.vmem [shape: f32[2,256,40], index: 7, kind: output, shape index: {0}]
  %s8 = inlined_call_operand.hbm [shape: f32[2,32,256], index: 8, kind: output, shape index: {1}]
  %9 = xla_tuple %s7, %s8
  %s10 = sld [smem:[#allocation0]]
  $region69: #{tpu_custom_call.1} parent=0
    _
  %s12 = ssub.s32 1, %s10
  %s13 = scalar_select 0, %s12, %s10
  $region1: #{tpu_custom_call.1} parent=0
    #allocation2 [shape = 'u8[32768]{0}', space=vmem, size = 0x8000, scoped, tag = 'output window, operand 1']
    #allocation3 [shape = 's32[2]{0}', space=sflag, size = 0x8, scoped, tag = 'scoped memory for tpu_custom_call.1']
    %14 = vsyncpa [#allocation3], 0
    %s15 = scalar_lea.sflag [#allocation3], 1
    %16 = vsyncpa %s15, 0
    loop: start=0, step=1, limit=6
    $region2: #{tpu_custom_call.1} parent=1 // loop_pre_header
      _
    $region3: #{tpu_custom_call.1} parent=1 // loop_header
      %s18 = sphi 0, %s22
      %p19 = scmp.ge.s32.totalorder %s18, 6
      %s25 = sphi 0, %s37
      %s26 = sphi 0, %s33
      %s27 = sphi 0, %s25
      %s28 = sphi 0, %s26
      %s29 = sphi 0, %s27
      %s30 = sphi 0, %s28
      %s42 = sphi 0, %s44
      %s45 = sphi 0, %s42
      %s46 = sphi 0, %s45
      %s62 = sphi 0, %s46
      %s66 = sphi 0, %s66
      %s68 = sphi 0, %s66
      %s69 = sphi 0, %s68
      %s83 = sphi 0, %s69
      %s87 = sphi 0, %s87
      %s89 = sphi 0, %s87
      %s90 = sphi 0, %s89
      %s104 = sphi 0, %s90
      %s108 = sphi 0, %s108
      %s110 = sphi 0, %s108
      %s111 = sphi 0, %s110
      %s125 = sphi 0, %s111
      %s129 = sphi 0, %s129
      %s131 = sphi 0, %s129
      %s132 = sphi 0, %s131
      %s146 = sphi 0, %s132
      %s150 = sphi 0, %s150
      %s152 = sphi 0, %s150
      %s153 = sphi 0, %s152
      %s167 = sphi 0, %s153
      %s171 = sphi 0, %s171
      %s173 = sphi 0, %s171
      %s174 = sphi 0, %s173
      %s188 = sphi 0, %s174
      %s196 = sphi 0, %s198
      %s199 = sphi 0, %s196
      %s200 = sphi 0, %s199
      %s216 = sphi 0, %s200
      %s224 = sphi 0, %s226
      %s227 = sphi 0, %s224
      %s228 = sphi 0, %s227
      %s244 = sphi 0, %s228
    $region4: #{tpu_custom_call.1} parent=1 // loop_header_branch
      %21 = sbr.rel (%p19) target = $region8
    $region5: #{tpu_custom_call.1} parent=1 // loop_body
      %s23 = ssub.s32 %s18, 1
      %s24 = ssub.s32 %s18, 2
      %s31 = sadd.s32 1, %s26
      %p32 = scmp.ge.s32.totalorder %s31, 2
      %s33 = scalar_select %p32, 0, %s31
      %s34 = sadd.s32 1, %s25
      %s35 = scalar_select %p32, %s34, %s25
      %p36 = scmp.ge.s32.totalorder %s35, 2
      %s37 = scalar_select %p36, 0, %s35
      %s38 = ssub.s32 %s25, %s37
      %s39 = ssub.s32 %s26, %s33
      %s40 = sor.u32 %s38, %s39
      %p41 = scmp.eq.s32.totalorder %s40, 0
      %s43 = sadd.s32 %s42, 1
      %s44 = scalar_select %p41, %s42, %s43
      %p47 = pneg %p41
      %p48 = scmp.eq.s32.totalorder %s18, 3
      %p49 = por %p47, %p48
      %p50 = scmp.ne.s32.totalorder %s42, %s45
      %p51 = scmp.eq.s32.totalorder %s18, 0
      %p52 = por %p50, %p51
      %p53 = scmp.ne.s32.totalorder %s42, %s45
      %p54 = scmp.eq.s32.totalorder %s23, 3
      %p55 = por %p53, %p54
      %p56 = scmp.ne.s32.totalorder %s45, %s46
      %p57 = scmp.eq.s32.totalorder %s23, 0
      %p58 = por %p56, %p57
      %p59 = scmp.ne.s32.totalorder %s45, %s46
      %p60 = scmp.eq.s32.totalorder %s24, 3
      %p61 = por %p59, %p60
      %p63 = scmp.ne.s32.totalorder %s46, %s62
      %p64 = scmp.eq.s32.totalorder %s24, 0
      %p65 = por %p63, %p64
      %s67 = sadd.s32 %s66, 1
      %p70 = scmp.eq.s32.totalorder %s18, 3
      %p71 = scmp.ne.s32.totalorder %s66, %s68
      %p72 = scmp.eq.s32.totalorder %s18, 0
      %p73 = por %p71, %p72
      %p74 = scmp.ne.s32.totalorder %s66, %s68
      %p75 = scmp.eq.s32.totalorder %s23, 3
      %p76 = por %p74, %p75
      %p77 = scmp.ne.s32.totalorder %s68, %s69
      %p78 = scmp.eq.s32.totalorder %s23, 0
      %p79 = por %p77, %p78
      %p80 = scmp.ne.s32.totalorder %s68, %s69
      %p81 = scmp.eq.s32.totalorder %s24, 3
      %p82 = por %p80, %p81
      %p84 = scmp.ne.s32.totalorder %s69, %s83
      %p85 = scmp.eq.s32.totalorder %s24, 0
      %p86 = por %p84, %p85
      %s88 = sadd.s32 %s87, 1
      %p91 = scmp.eq.s32.totalorder %s18, 3
      %p92 = scmp.ne.s32.totalorder %s87, %s89
      %p93 = scmp.eq.s32.totalorder %s18, 0
      %p94 = por %p92, %p93
      %p95 = scmp.ne.s32.totalorder %s87, %s89
      %p96 = scmp.eq.s32.totalorder %s23, 3
      %p97 = por %p95, %p96
      %p98 = scmp.ne.s32.totalorder %s89, %s90
      %p99 = scmp.eq.s32.totalorder %s23, 0
      %p100 = por %p98, %p99
      %p101 = scmp.ne.s32.totalorder %s89, %s90
      %p102 = scmp.eq.s32.totalorder %s24, 3
      %p103 = por %p101, %p102
      %p105 = scmp.ne.s32.totalorder %s90, %s104
      %p106 = scmp.eq.s32.totalorder %s24, 0
      %p107 = por %p105, %p106
      %s109 = sadd.s32 %s108, 1
      %p112 = scmp.eq.s32.totalorder %s18, 3
      %p113 = scmp.ne.s32.totalorder %s108, %s110
      %p114 = scmp.eq.s32.totalorder %s18, 0
      %p115 = por %p113, %p114
      %p116 = scmp.ne.s32.totalorder %s108, %s110
      %p117 = scmp.eq.s32.totalorder %s23, 3
      %p118 = por %p116, %p117
      %p119 = scmp.ne.s32.totalorder %s110, %s111
      %p120 = scmp.eq.s32.totalorder %s23, 0
      %p121 = por %p119, %p120
      %p122 = scmp.ne.s32.totalorder %s110, %s111
      %p123 = scmp.eq.s32.totalorder %s24, 3
      %p124 = por %p122, %p123
      %p126 = scmp.ne.s32.totalorder %s111, %s125
      %p127 = scmp.eq.s32.totalorder %s24, 0
      %p128 = por %p126, %p127
      %s130 = sadd.s32 %s129, 1
      %p133 = scmp.eq.s32.totalorder %s18, 3
      %p134 = scmp.ne.s32.totalorder %s129, %s131
      %p135 = scmp.eq.s32.totalorder %s18, 0
      %p136 = por %p134, %p135
      %p137 = scmp.ne.s32.totalorder %s129, %s131
      %p138 = scmp.eq.s32.totalorder %s23, 3
      %p139 = por %p137, %p138
      %p140 = scmp.ne.s32.totalorder %s131, %s132
      %p141 = scmp.eq.s32.totalorder %s23, 0
      %p142 = por %p140, %p141
      %p143 = scmp.ne.s32.totalorder %s131, %s132
      %p144 = scmp.eq.s32.totalorder %s24, 3
      %p145 = por %p143, %p144
      %p147 = scmp.ne.s32.totalorder %s132, %s146
      %p148 = scmp.eq.s32.totalorder %s24, 0
      %p149 = por %p147, %p148
      %s151 = sadd.s32 %s150, 1
      %p154 = scmp.eq.s32.totalorder %s18, 3
      %p155 = scmp.ne.s32.totalorder %s150, %s152
      %p156 = scmp.eq.s32.totalorder %s18, 0
      %p157 = por %p155, %p156
      %p158 = scmp.ne.s32.totalorder %s150, %s152
      %p159 = scmp.eq.s32.totalorder %s23, 3
      %p160 = por %p158, %p159
      %p161 = scmp.ne.s32.totalorder %s152, %s153
      %p162 = scmp.eq.s32.totalorder %s23, 0
      %p163 = por %p161, %p162
      %p164 = scmp.ne.s32.totalorder %s152, %s153
      %p165 = scmp.eq.s32.totalorder %s24, 3
      %p166 = por %p164, %p165
      %p168 = scmp.ne.s32.totalorder %s153, %s167
      %p169 = scmp.eq.s32.totalorder %s24, 0
      %p170 = por %p168, %p169
      %s172 = sadd.s32 %s171, 1
      %p175 = scmp.eq.s32.totalorder %s18, 3
      %p176 = scmp.ne.s32.totalorder %s171, %s173
      %p177 = scmp.eq.s32.totalorder %s18, 0
      %p178 = por %p176, %p177
      %p179 = scmp.ne.s32.totalorder %s171, %s173
      %p180 = scmp.eq.s32.totalorder %s23, 3
      %p181 = por %p179, %p180
      %p182 = scmp.ne.s32.totalorder %s173, %s174
      %p183 = scmp.eq.s32.totalorder %s23, 0
      %p184 = por %p182, %p183
      %p185 = scmp.ne.s32.totalorder %s173, %s174
      %p186 = scmp.eq.s32.totalorder %s24, 3
      %p187 = por %p185, %p186
      %p189 = scmp.ne.s32.totalorder %s174, %s188
      %p190 = scmp.eq.s32.totalorder %s24, 0
      %p191 = por %p189, %p190
      %s192 = ssub.s32 %s25, %s37
      %s193 = ssub.s32 %s26, %s33
      %s194 = sor.u32 %s192, %s193
      %p195 = scmp.eq.s32.totalorder %s194, 0
      %s197 = sadd.s32 %s196, 1
      %s198 = scalar_select %p195, %s196, %s197
      %p201 = pneg %p195
      %p202 = scmp.eq.s32.totalorder %s18, 3
      %p203 = por %p201, %p202
      %p204 = scmp.ne.s32.totalorder %s196, %s199
      %p205 = scmp.eq.s32.totalorder %s18, 0
      %p206 = por %p204, %p205
      %p207 = scmp.ne.s32.totalorder %s196, %s199
      %p208 = scmp.eq.s32.totalorder %s23, 3
      %p209 = por %p207, %p208
      %p210 = scmp.ne.s32.totalorder %s199, %s200
      %p211 = scmp.eq.s32.totalorder %s23, 0
      %p212 = por %p210, %p211
      %p213 = scmp.ne.s32.totalorder %s199, %s200
      %p214 = scmp.eq.s32.totalorder %s24, 3
      %p215 = por %p213, %p214
      %p217 = scmp.ne.s32.totalorder %s200, %s216
      %p218 = scmp.eq.s32.totalorder %s24, 0
      %p219 = por %p217, %p218
      %s220 = ssub.s32 %s25, %s37
      %s221 = ssub.s32 %s26, %s33
      %s222 = sor.u32 %s220, %s221
      %p223 = scmp.eq.s32.totalorder %s222, 0
      %s225 = sadd.s32 %s224, 1
      %s226 = scalar_select %p223, %s224, %s225
      %p229 = pneg %p223
      %p230 = scmp.eq.s32.totalorder %s18, 3
      %p231 = por %p229, %p230
      %p232 = scmp.ne.s32.totalorder %s224, %s227
      %p233 = scmp.eq.s32.totalorder %s18, 0
      %p234 = por %p232, %p233
      %p235 = scmp.ne.s32.totalorder %s224, %s227
      %p236 = scmp.eq.s32.totalorder %s23, 3
      %p237 = por %p235, %p236
      %p238 = scmp.ne.s32.totalorder %s227, %s228
      %p239 = scmp.eq.s32.totalorder %s23, 0
      %p240 = por %p238, %p239
      %p241 = scmp.ne.s32.totalorder %s227, %s228
      %p242 = scmp.eq.s32.totalorder %s24, 3
      %p243 = por %p241, %p242
      %p245 = scmp.ne.s32.totalorder %s228, %s244
      %p246 = scmp.eq.s32.totalorder %s24, 0
      %p247 = por %p245, %p246
      %p248 = scmp.le.s32.totalorder 1, %s18
      %p249 = scmp.lt.s32.totalorder %s18, 5
      %p250 = pnand %p248, %p249
      %p251 = pneg %p250
      // Predicated region
      $region9: #{tpu_custom_call.1} parent=5 // pred_check
        _
      $region10: #{tpu_custom_call.1} parent=5 // pred_check_branch
        %253 = sbr.rel (%p250) target = $region12
      $region11: #{tpu_custom_call.1} parent=5 // pred_region
        %s254 = ssub.s32 %s18, 1
        // Predicated region
        $region13: #{tpu_custom_call.1} parent=11 // pred_check
          %p255 = pneg %p79
        $region14: #{tpu_custom_call.1} parent=11 // pred_check_branch
          %257 = sbr.rel (%p255) target = $region16
        $region15: #{tpu_custom_call.1} parent=11 // pred_region
          _
        $region16: #{tpu_custom_call.1} parent=11 // pred_fallthru
          _
        // Predicated region
        $region17: #{tpu_custom_call.1} parent=11 // pred_check
          %p258 = pneg %p100
        $region18: #{tpu_custom_call.1} parent=11 // pred_check_branch
          %260 = sbr.rel (%p258) target = $region20
        $region19: #{tpu_custom_call.1} parent=11 // pred_region
          _
        $region20: #{tpu_custom_call.1} parent=11 // pred_fallthru
          _
        // Predicated region
        $region21: #{tpu_custom_call.1} parent=11 // pred_check
          %p261 = pneg %p121
        $region22: #{tpu_custom_call.1} parent=11 // pred_check_branch
          %263 = sbr.rel (%p261) target = $region24
        $region23: #{tpu_custom_call.1} parent=11 // pred_region
          _
        $region24: #{tpu_custom_call.1} parent=11 // pred_fallthru
          _
        // Predicated region
        $region25: #{tpu_custom_call.1} parent=11 // pred_check
          %p264 = pneg %p142
        $region26: #{tpu_custom_call.1} parent=11 // pred_check_branch
          %266 = sbr.rel (%p264) target = $region28
        $region27: #{tpu_custom_call.1} parent=11 // pred_region
          _
        $region28: #{tpu_custom_call.1} parent=11 // pred_fallthru
          _
        // Predicated region
        $region29: #{tpu_custom_call.1} parent=11 // pred_check
          %p267 = pneg %p163
        $region30: #{tpu_custom_call.1} parent=11 // pred_check_branch
          %269 = sbr.rel (%p267) target = $region32
        $region31: #{tpu_custom_call.1} parent=11 // pred_region
          _
        $region32: #{tpu_custom_call.1} parent=11 // pred_fallthru
          _
        // Predicated region
        $region33: #{tpu_custom_call.1} parent=11 // pred_check
          %p270 = pneg %p184
        $region34: #{tpu_custom_call.1} parent=11 // pred_check_branch
          %272 = sbr.rel (%p270) target = $region36
        $region35: #{tpu_custom_call.1} parent=11 // pred_region
          _
        $region36: #{tpu_custom_call.1} parent=11 // pred_fallthru
          _
      $region12: #{tpu_custom_call.1} parent=5 // pred_fallthru
        _
      %p273 = scmp.lt.s32.totalorder %s18, 4
      // Predicated region
      $region37: #{tpu_custom_call.1} parent=5 // pred_check
        %p274 = pneg %p273
      $region38: #{tpu_custom_call.1} parent=5 // pred_check_branch
        %276 = sbr.rel (%p274) target = $region40
      $region39: #{tpu_custom_call.1} parent=5 // pred_region
        // Predicated region
        $region41: #{tpu_custom_call.1} parent=39 // pred_check
          %p277 = pneg %p52
        $region42: #{tpu_custom_call.1} parent=39 // pred_check_branch
          %279 = sbr.rel (%p277) target = $region44
        $region43: #{tpu_custom_call.1} parent=39 // pred_region
          %p280 = scmp.lt.s32.totalorder %s25, 1
          %s281 = scalar_select %p280, %s25, 1
          %p282 = scmp.lt.s32.totalorder %s26, 1
          %s283 = scalar_select %p282, %s26, 1
          %s284 = smul.addr %s283, 17
          %s285 = smul.addr %s281, 34
          %s286 = sadd.s32 %s284, %s285
          %s287 = smul.addr %s286, 4
          %s288 = scalar_lea.vmem %s0, %s287
        $region44: #{tpu_custom_call.1} parent=39 // pred_fallthru
          _
      $region40: #{tpu_custom_call.1} parent=5 // pred_fallthru
        _
      %p289 = scmp.le.s32.totalorder 1, %s18
      %p290 = scmp.lt.s32.totalorder %s18, 5
      %p291 = pnand %p289, %p290
      %p292 = pneg %p291
      // Predicated region
      $region45: #{tpu_custom_call.1} parent=5 // pred_check
        _
      $region46: #{tpu_custom_call.1} parent=5 // pred_check_branch
        %294 = sbr.rel (%p291) target = $region48
      $region47: #{tpu_custom_call.1} parent=5 // pred_region
        %s295 = ssub.s32 %s18, 1
        %p296 = scmp.lt.s32.totalorder %s27, 1
        %s297 = scalar_select %p296, %s27, 1
        %p298 = scmp.lt.s32.totalorder %s28, 1
        %s299 = scalar_select %p298, %s28, 1
        %s300 = smul.addr %s299, 17
        %s301 = smul.addr %s297, 34
        %s302 = sadd.s32 %s300, %s301
        %s303 = smul.addr %s302, 4
        %s304 = scalar_lea.vmem %s0, %s303
        %p305 = pneg %p58
        %p306 = pneg %p55
        %p307 = pneg %p79
        %p308 = pneg %p76
        %p309 = pneg %p100
        %p310 = pneg %p97
        %p311 = pneg %p121
        %p312 = pneg %p118
        %p313 = pneg %p142
        %p314 = pneg %p139
        %p315 = pneg %p163
        %p316 = pneg %p160
        %p317 = pneg %p184
        %p318 = pneg %p181
        %p319 = pneg %p212
        %p320 = pneg %p209
        %s321 = smul.u32 16, %s28
        %p322 = scmp.lt.s32.totalorder %s27, 1
        %s323 = scalar_select %p322, %s27, 1
        %p324 = scmp.lt.s32.totalorder %s321, 31
        %s325 = scalar_select %p324, %s321, 31
        %s326 = smul.addr %s323, 32
        %s327 = sadd.s32 %s325, %s326
        %s328 = smul.addr %s327, 8
        %s329 = scalar_lea.vmem %s7, %s328
        %p330 = pneg %p240
        %p331 = pneg %p237
        %s332 = sand.u32 %s227, 1
        %s333 = scalar_lea.sflag [#allocation3], %s332
        %s334 = sand.u32 %s227, 1
        %s335 = smul.addr %s334, 32
        %s336 = scalar_lea.vmem [#allocation2], %s335
        %p337 = scmp.lt.s32.totalorder %s27, 1
        %s338 = scalar_select %p337, %s27, 1
        %p339 = scmp.lt.s32.totalorder %s28, 1
        %s340 = scalar_select %p339, %s28, 1
        %s341 = smul.addr %s340, 17
        %s342 = smul.addr %s338, 34
        %s343 = sadd.s32 %s341, %s342
        %s344 = smul.addr %s343, 4
        %s345 = scalar_lea.vmem %s0, %s344
        %s346 = smul.u32 16, %s28
        %p347 = scmp.lt.s32.totalorder %s27, 1
        %s348 = scalar_select %p347, %s27, 1
        %p349 = scmp.lt.s32.totalorder %s346, 31
        %s350 = scalar_select %p349, %s346, 31
        %s351 = smul.addr %s348, 32
        %s352 = sadd.s32 %s350, %s351
        %s353 = smul.addr %s352, 8
        %s354 = scalar_lea.vmem %s7, %s353
        %s355 = smul.u32 16, %s28
        %s357 = smul.u32 %s28, 128
        %s358 = ssub.s32 %s357, 4
        %v359 = vlaneseq
        %v360 = vand.u32 %v359, 127
        %v361 = vadd.s32 %v360, 128
        %v362 = vstv %s358
        %v363 = vadd.s32 %v362, %v360
        %v364 = vadd.s32 %v362, %v361
        %vm365 = vcmp.ge.s32.totalorder %v363, 0
        %vm366 = vcmp.ge.s32.totalorder %v364, 0
        %vm367 = vcmp.lt.s32.totalorder %v363, 250
        %vm368 = vcmp.lt.s32.totalorder %v364, 250
        %vm369 = vmand %vm365, %vm367
        %vm370 = vmand %vm366, %vm368
        %v371 = vld [vmem:[%s1] sm:$0xf]
        %v372 = vld [vmem:[%s1 + $0x4] sm:$0xf]
        %v373 = vld [vmem:[%s1 + $0x8] sm:$0xf]
        %v374 = vld [vmem:[%s1 + $0xc] sm:$0xf]
        %v375 = vld [vmem:[%s2] sm:$0xff]
        %v376 = vld [vmem:[%s2 + $0x8] sm:$0xff]
        %v377 = vld [vmem:[%s2 + $0x10] sm:$0xff]
        %v378 = vld [vmem:[%s2 + $0x18] sm:$0xff]
        %v379 = vsel %vm369, 1, 0
        %v380 = vsel %vm370, 1, 0
        %vm381 = vcmp.eq.s32.totalorder %v379, 1
        %vm382 = vcmp.eq.s32.totalorder %v380, 1
        %384 = vset.pattern.permute.xlu0 0
        %385 = vperm.xlu0 %384, %v375
        %v386 = vpop.permute.xlu0 %385
        %389 = vset.pattern.permute.xlu0 0
        %390 = vperm.xlu0 %389, %v376
        %v391 = vpop.permute.xlu0 %390
        %394 = vset.pattern.permute.xlu0 0
        %395 = vperm.xlu0 %394, %v377
        %v396 = vpop.permute.xlu0 %395
        %399 = vset.pattern.permute.xlu0 0
        %400 = vperm.xlu0 %399, %v378
        %v401 = vpop.permute.xlu0 %400
        %v403 = vsel %vm381, %v386, 0.0
        %v404 = vsel %vm382, %v386, 0.0
        %v405 = vsel %vm381, %v391, 0.0
        %v406 = vsel %vm382, %v391, 0.0
        %v407 = vsel %vm381, %v396, 0.0
        %v408 = vsel %vm382, %v396, 0.0
        %v409 = vsel %vm381, %v401, 0.0
        %v410 = vsel %vm382, %v401, 0.0
        %v411 = vld [vmem:[%s3] sm:$0xff]
        %v412 = vld [vmem:[%s3 + $0x8] sm:$0xff]
        %v413 = vld [vmem:[%s3 + $0x10] sm:$0xff]
        %v414 = vld [vmem:[%s3 + $0x18] sm:$0xff]
        %v415 = vld [vmem:[%s4] sm:$0xff]
        %v416 = vld [vmem:[%s4 + $0x8] sm:$0xff]
        %v417 = vld [vmem:[%s4 + $0x10] sm:$0xff]
        %v418 = vld [vmem:[%s4 + $0x18] sm:$0xff]
        %v419 = vld [vmem:[%s5] sm:$0xf]
        %v420 = vld [vmem:[%s5 + $0x4] sm:$0xf]
        %v421 = vld [vmem:[%s5 + $0x8] sm:$0xf]
        %v422 = vld [vmem:[%s5 + $0xc] sm:$0xf]
        %v423 = vld [vmem:[%s6] sm:$0x1]
        %v424 = vld [vmem:[%s345] sm:$0xf]
        %v425 = vld [vmem:[%s345 + $0x4] sm:$0xf]
        %v426 = vld [vmem:[%s345 + $0x8] sm:$0xf]
        %v427 = vld [vmem:[%s345 + $0xc] sm:$0xf]
        %v428 = vld [vmem:[%s345 + $0x10] sm:$0xf]
        %v429 = vld [vmem:[%s345 + $0x14] sm:$0xf]
        %v430 = vld [vmem:[%s345 + $0x18] sm:$0xf]
        %v431 = vld [vmem:[%s345 + $0x1c] sm:$0xf]
        %v432 = vld [vmem:[%s345 + $0x20] sm:$0xf]
        %v433 = vld [vmem:[%s345 + $0x24] sm:$0xf]
        %v434 = vld [vmem:[%s345 + $0x28] sm:$0xf]
        %v435 = vld [vmem:[%s345 + $0x2c] sm:$0xf]
        %v436 = vld [vmem:[%s345 + $0x30] sm:$0xf]
        %v437 = vld [vmem:[%s345 + $0x34] sm:$0xf]
        %v438 = vld [vmem:[%s345 + $0x38] sm:$0xf]
        %v439 = vld [vmem:[%s345 + $0x3c] sm:$0xf]
        %v440 = vld [vmem:[%s345 + $0x40] sm:$0x7]
        %v445 = vunpack.c.l.b16 %v371
        %v446 = vunpack.c.l.b16 %v372
        %v447 = vunpack.c.l.b16 %v373
        %v448 = vunpack.c.l.b16 %v374
        %v449 = vpack.c.b16 %v446, %v445
        %v450 = vpack.c.b16 %v448, %v447
        %v468 = vunpack.c.l.b16 %v424
        %v469 = vunpack.c.l.b16 %v425
        %v470 = vunpack.c.l.b16 %v426
        %v471 = vunpack.c.l.b16 %v427
        %v472 = vunpack.c.l.b16 %v428
        %v473 = vunpack.c.l.b16 %v429
        %v474 = vunpack.c.l.b16 %v430
        %v475 = vunpack.c.l.b16 %v431
        %v476 = vunpack.c.l.b16 %v432
        %v477 = vunpack.c.l.b16 %v433
        %v478 = vunpack.c.l.b16 %v434
        %v479 = vunpack.c.l.b16 %v435
        %v480 = vunpack.c.l.b16 %v436
        %v481 = vunpack.c.l.b16 %v437
        %v482 = vunpack.c.l.b16 %v438
        %v483 = vunpack.c.l.b16 %v439
        %v484 = vunpack.c.l.b16 %v440
        %v485 = vpack.c.b16 %v469, %v468
        %v486 = vpack.c.b16 %v471, %v470
        %v487 = vpack.c.b16 %v473, %v472
        %v488 = vpack.c.b16 %v475, %v474
        %v489 = vpack.c.b16 %v477, %v476
        %v490 = vpack.c.b16 %v479, %v478
        %v491 = vpack.c.b16 %v481, %v480
        %v492 = vpack.c.b16 %v483, %v482
        %v493 = vpack.c.b16 %v484, %v484
        %vm494 = vcmask 195584
        %v496 = vsel %vm494, %v449, 0
        %v499 = vsel %vm494, %v450, 0
        %v502 = vsel %vm494, %v485, 0
        %v505 = vsel %vm494, %v486, 0
        %v508 = vsel %vm494, %v487, 0
        %v511 = vsel %vm494, %v488, 0
        %v514 = vsel %vm494, %v489, 0
        %v517 = vsel %vm494, %v490, 0
        %v520 = vsel %vm494, %v491, 0
        %v523 = vsel %vm494, %v492, 0
        %v526 = vsel %vm494, %v493, 0
        %528 = vmatprep.subr.bf16.mxu0 0
        %529 = vmatpush1.bf16.xpose.msra.mxu0 %v502
        %530 = vmatprep.subr.bf16.mxu0 0
        %531 = vmatpush1.bf16.xpose.msra.mxu0 %v505
        %532 = vmatprep.subr.bf16.mxu0 0
        %533 = vmatpush1.bf16.xpose.msra.mxu0 %v508
        %534 = vmatprep.subr.bf16.mxu0 0
        %535 = vmatpush1.bf16.xpose.msra.mxu0 %v511
        %536 = vmatprep.subr.bf16.mxu0 0
        %537 = vmatpush1.bf16.xpose.msra.mxu0 %v514
        %538 = vmatprep.subr.bf16.mxu0 0
        %539 = vmatpush1.bf16.xpose.msra.mxu0 %v517
        %540 = vmatprep.subr.bf16.mxu0 0
        %541 = vmatpush1.bf16.xpose.msra.mxu0 %v520
        %542 = vmatprep.subr.bf16.mxu0 0
        %543 = vmatpush1.bf16.xpose.msra.mxu0 %v523
        %544 = vmatprep.subr.bf16.mxu0 0
        %545 = vmatpush1.bf16.xpose.msra.mxu0 %v526
        %546 = vmatprep.subr.bf16.mxu0 0
        %547 = vmatpush1.bf16.xpose.msra.mxu0 0
        %548 = vmatprep.subr.bf16.mxu0 0
        %549 = vmatpush1.bf16.xpose.msra.mxu0 0
        %550 = vmatprep.subr.bf16.mxu0 0
        %551 = vmatpush1.bf16.xpose.msra.mxu0 0
        %552 = vmatprep.subr.bf16.mxu0 0
        %553 = vmatpush1.bf16.xpose.msra.mxu0 0
        %554 = vmatprep.subr.bf16.mxu0 0
        %555 = vmatpush1.bf16.xpose.msra.mxu0 0
        %556 = vmatprep.subr.bf16.mxu0 0
        %557 = vmatpush1.bf16.xpose.msra.mxu0 0
        %558 = vmatprep.subr.bf16.mxu0 0
        %559 = vmatpush1.bf16.xpose.msra.mxu0 0
        %560 = vmatprep.mubr.bf16.mxu0 0
        %561 = vmatmul.mubr.bf16.gmra.mrb[0].mxu0 %v496
        %v562 = vpop.f32.mrb[0].mxu0
        %v563 = vadd.f32 %v403, %v562
        %v564 = vpop.f32.mrb[0].mxu0
        %v565 = vadd.f32 %v404, %v564
        %v566 = vpop.f32.mrb[0].mxu0
        %v567 = vadd.f32 %v405, %v566
        %v568 = vpop.f32.mrb[0].mxu0
        %v569 = vadd.f32 %v406, %v568
        %570 = vmatprep.mubr.bf16.mxu0 0
        %571 = vmatmul.mubr.bf16.gmra.mrb[0].mxu0 %v499
        %v572 = vpop.f32.mrb[0].mxu0
        %v573 = vadd.f32 %v407, %v572
        %v574 = vpop.f32.mrb[0].mxu0
        %v575 = vadd.f32 %v408, %v574
        %v576 = vpop.f32.mrb[0].mxu0
        %v577 = vadd.f32 %v409, %v576
        %v578 = vpop.f32.mrb[0].mxu0
        %v579 = vadd.f32 %v410, %v578
        %580 = vdwg.mxu0
        %582 = vset.pattern.permute.xlu0 2
        %583 = vperm.xlu0 %582, %v411
        %v584 = vpop.permute.xlu0 %583
        %587 = vset.pattern.permute.xlu0 2
        %588 = vperm.xlu0 %587, %v412
        %v589 = vpop.permute.xlu0 %588
        %592 = vset.pattern.permute.xlu0 2
        %593 = vperm.xlu0 %592, %v413
        %v594 = vpop.permute.xlu0 %593
        %597 = vset.pattern.permute.xlu0 2
        %598 = vperm.xlu0 %597, %v414
        %v599 = vpop.permute.xlu0 %598
        %v601 = vmul.f32 %v563, %v584
        %v602 = vmul.f32 %v565, %v584
        %v603 = vmul.f32 %v567, %v589
        %v604 = vmul.f32 %v569, %v589
        %v605 = vmul.f32 %v573, %v594
        %v606 = vmul.f32 %v575, %v594
        %v607 = vmul.f32 %v577, %v599
        %v608 = vmul.f32 %v579, %v599
        %609 = vset.pattern.permute.xlu0 0
        %610 = vperm.xlu0 %609, %v411
        %v611 = vpop.permute.xlu0 %610
        %613 = vset.pattern.permute.xlu0 0
        %614 = vperm.xlu0 %613, %v412
        %v615 = vpop.permute.xlu0 %614
        %617 = vset.pattern.permute.xlu0 0
        %618 = vperm.xlu0 %617, %v413
        %v619 = vpop.permute.xlu0 %618
        %621 = vset.pattern.permute.xlu0 0
        %622 = vperm.xlu0 %621, %v414
        %v623 = vpop.permute.xlu0 %622
        %v625 = vmul.f32 %v563, %v611
        %v626 = vmul.f32 %v567, %v615
        %v627 = vmul.f32 %v573, %v619
        %v628 = vmul.f32 %v577, %v623
        %633 = vrot.lane.b32.xlu0 %v625, 4
        %v634 = vpop.permute.xlu0 %633
        %635 = vrot.lane.b32.xlu0 %v626, 4
        %v636 = vpop.permute.xlu0 %635
        %637 = vrot.lane.b32.xlu0 %v627, 4
        %v638 = vpop.permute.xlu0 %637
        %639 = vrot.lane.b32.xlu0 %v628, 4
        %v640 = vpop.permute.xlu0 %639
        %v645 = vadd.f32 %v601, %v634
        %v646 = vadd.f32 %v602, %v634
        %v647 = vadd.f32 %v603, %v636
        %v648 = vadd.f32 %v604, %v636
        %v649 = vadd.f32 %v605, %v638
        %v650 = vadd.f32 %v606, %v638
        %v651 = vadd.f32 %v607, %v640
        %v652 = vadd.f32 %v608, %v640
        %653 = vset.pattern.permute.xlu0 1
        %654 = vperm.xlu0 %653, %v411
        %v655 = vpop.permute.xlu0 %654
        %657 = vset.pattern.permute.xlu0 1
        %658 = vperm.xlu0 %657, %v412
        %v659 = vpop.permute.xlu0 %658
        %661 = vset.pattern.permute.xlu0 1
        %662 = vperm.xlu0 %661, %v413
        %v663 = vpop.permute.xlu0 %662
        %665 = vset.pattern.permute.xlu0 1
        %666 = vperm.xlu0 %665, %v414
        %v667 = vpop.permute.xlu0 %666
        %v669 = vmul.f32 %v563, %v655
        %v670 = vmul.f32 %v565, %v655
        %v671 = vmul.f32 %v567, %v659
        %v672 = vmul.f32 %v569, %v659
        %v673 = vmul.f32 %v573, %v663
        %v674 = vmul.f32 %v575, %v663
        %v675 = vmul.f32 %v577, %v667
        %v676 = vmul.f32 %v579, %v667
        %685 = vrot.lane.b32.xlu0 %v669, 2
        %v686 = vpop.permute.xlu0 %685
        %687 = vrot.lane.b32.xlu0 %v670, 2
        %v688 = vpop.permute.xlu0 %687
        %689 = vrot.lane.b32.xlu0 %v671, 2
        %v690 = vpop.permute.xlu0 %689
        %691 = vrot.lane.b32.xlu0 %v672, 2
        %v692 = vpop.permute.xlu0 %691
        %693 = vrot.lane.b32.xlu0 %v673, 2
        %v694 = vpop.permute.xlu0 %693
        %695 = vrot.lane.b32.xlu0 %v674, 2
        %v696 = vpop.permute.xlu0 %695
        %697 = vrot.lane.b32.xlu0 %v675, 2
        %v698 = vpop.permute.xlu0 %697
        %699 = vrot.lane.b32.xlu0 %v676, 2
        %v700 = vpop.permute.xlu0 %699
        %vm701 = vcmask 15360
        %v702 = vsel %vm701, %v686, %v688
        %v703 = vsel %vm701, %v690, %v692
        %v704 = vsel %vm701, %v694, %v696
        %v705 = vsel %vm701, %v698, %v700
        %v714 = vadd.f32 %v645, %v686
        %v715 = vadd.f32 %v646, %v702
        %v716 = vadd.f32 %v647, %v690
        %v717 = vadd.f32 %v648, %v703
        %v718 = vadd.f32 %v649, %v694
        %v719 = vadd.f32 %v650, %v704
        %v720 = vadd.f32 %v651, %v698
        %v721 = vadd.f32 %v652, %v705
        %723 = vset.pattern.permute.xlu0 0
        %724 = vperm.xlu0 %723, %v415
        %v725 = vpop.permute.xlu0 %724
        %728 = vset.pattern.permute.xlu0 0
        %729 = vperm.xlu0 %728, %v416
        %v730 = vpop.permute.xlu0 %729
        %733 = vset.pattern.permute.xlu0 0
        %734 = vperm.xlu0 %733, %v417
        %v735 = vpop.permute.xlu0 %734
        %738 = vset.pattern.permute.xlu0 0
        %739 = vperm.xlu0 %738, %v418
        %v740 = vpop.permute.xlu0 %739
        %v742 = vmul.f32 %v563, %v725
        %v743 = vmul.f32 %v565, %v725
        %v744 = vmul.f32 %v567, %v730
        %v745 = vmul.f32 %v569, %v730
        %v746 = vmul.f32 %v573, %v735
        %v747 = vmul.f32 %v575, %v735
        %v748 = vmul.f32 %v577, %v740
        %v749 = vmul.f32 %v579, %v740
        %758 = vrot.lane.b32.xlu0 %v742, 127
        %v759 = vpop.permute.xlu0 %758
        %760 = vrot.lane.b32.xlu0 %v743, 127
        %v761 = vpop.permute.xlu0 %760
        %762 = vrot.lane.b32.xlu0 %v744, 127
        %v763 = vpop.permute.xlu0 %762
        %764 = vrot.lane.b32.xlu0 %v745, 127
        %v765 = vpop.permute.xlu0 %764
        %766 = vrot.lane.b32.xlu0 %v746, 127
        %v767 = vpop.permute.xlu0 %766
        %768 = vrot.lane.b32.xlu0 %v747, 127
        %v769 = vpop.permute.xlu0 %768
        %770 = vrot.lane.b32.xlu0 %v748, 127
        %v771 = vpop.permute.xlu0 %770
        %772 = vrot.lane.b32.xlu0 %v749, 127
        %v773 = vpop.permute.xlu0 %772
        %vm774 = vcmask 1039360
        %v775 = vsel %vm774, %v759, %v761
        %v776 = vsel %vm774, %v763, %v765
        %v777 = vsel %vm774, %v767, %v769
        %v778 = vsel %vm774, %v771, %v773
        %v787 = vadd.f32 %v714, %v775
        %v788 = vadd.f32 %v715, %v761
        %v789 = vadd.f32 %v716, %v776
        %v790 = vadd.f32 %v717, %v765
        %v791 = vadd.f32 %v718, %v777
        %v792 = vadd.f32 %v719, %v769
        %v793 = vadd.f32 %v720, %v778
        %v794 = vadd.f32 %v721, %v773
        %795 = vset.pattern.permute.xlu0 1
        %796 = vperm.xlu0 %795, %v415
        %v797 = vpop.permute.xlu0 %796
        %799 = vset.pattern.permute.xlu0 1
        %800 = vperm.xlu0 %799, %v416
        %v801 = vpop.permute.xlu0 %800
        %803 = vset.pattern.permute.xlu0 1
        %804 = vperm.xlu0 %803, %v417
        %v805 = vpop.permute.xlu0 %804
        %807 = vset.pattern.permute.xlu0 1
        %808 = vperm.xlu0 %807, %v418
        %v809 = vpop.permute.xlu0 %808
        %v811 = vmul.f32 %v563, %v797
        %v812 = vmul.f32 %v565, %v797
        %v813 = vmul.f32 %v567, %v801
        %v814 = vmul.f32 %v569, %v801
        %v815 = vmul.f32 %v573, %v805
        %v816 = vmul.f32 %v575, %v805
        %v817 = vmul.f32 %v577, %v809
        %v818 = vmul.f32 %v579, %v809
        %827 = vrot.lane.b32.xlu0 %v811, 126
        %v828 = vpop.permute.xlu0 %827
        %829 = vrot.lane.b32.xlu0 %v812, 126
        %v830 = vpop.permute.xlu0 %829
        %831 = vrot.lane.b32.xlu0 %v813, 126
        %v832 = vpop.permute.xlu0 %831
        %833 = vrot.lane.b32.xlu0 %v814, 126
        %v834 = vpop.permute.xlu0 %833
        %835 = vrot.lane.b32.xlu0 %v815, 126
        %v836 = vpop.permute.xlu0 %835
        %837 = vrot.lane.b32.xlu0 %v816, 126
        %v838 = vpop.permute.xlu0 %837
        %839 = vrot.lane.b32.xlu0 %v817, 126
        %v840 = vpop.permute.xlu0 %839
        %841 = vrot.lane.b32.xlu0 %v818, 126
        %v842 = vpop.permute.xlu0 %841
        %vm843 = vcmask 1031168
        %v844 = vsel %vm843, %v828, %v830
        %v845 = vsel %vm843, %v832, %v834
        %v846 = vsel %vm843, %v836, %v838
        %v847 = vsel %vm843, %v840, %v842
        %v856 = vadd.f32 %v787, %v844
        %v857 = vadd.f32 %v788, %v830
        %v858 = vadd.f32 %v789, %v845
        %v859 = vadd.f32 %v790, %v834
        %v860 = vadd.f32 %v791, %v846
        %v861 = vadd.f32 %v792, %v838
        %v862 = vadd.f32 %v793, %v847
        %v863 = vadd.f32 %v794, %v842
        %872 = vrot.lane.b32.xlu0 %v856, 124
        %v873 = vpop.permute.xlu0 %872
        %874 = vrot.lane.b32.xlu0 %v857, 124
        %v875 = vpop.permute.xlu0 %874
        %876 = vrot.lane.b32.xlu0 %v858, 124
        %v877 = vpop.permute.xlu0 %876
        %878 = vrot.lane.b32.xlu0 %v859, 124
        %v879 = vpop.permute.xlu0 %878
        %880 = vrot.lane.b32.xlu0 %v860, 124
        %v881 = vpop.permute.xlu0 %880
        %882 = vrot.lane.b32.xlu0 %v861, 124
        %v883 = vpop.permute.xlu0 %882
        %884 = vrot.lane.b32.xlu0 %v862, 124
        %v885 = vpop.permute.xlu0 %884
        %886 = vrot.lane.b32.xlu0 %v863, 124
        %v887 = vpop.permute.xlu0 %886
        %vm888 = vcmask 1014784
        %v889 = vsel %vm888, %v873, %v875
        %v890 = vsel %vm888, %v877, %v879
        %v891 = vsel %vm888, %v881, %v883
        %v892 = vsel %vm888, %v885, %v887
        %897 = vst [vmem:[%s336] sm:$0xff] %v889
        %898 = vst [vmem:[%s336 + $0x8] sm:$0xff] %v890
        %899 = vst [vmem:[%s336 + $0x10] sm:$0xff] %v891
        %900 = vst [vmem:[%s336 + $0x18] sm:$0xff] %v892
        %v901 = vpack.c.bf16 %v858, %v856
        %v902 = vpack.c.bf16 %v859, %v857
        %v903 = vpack.c.bf16 %v862, %v860
        %v904 = vpack.c.bf16 %v863, %v861
        %v906 = vlaneseq
        %v907 = vshrl.u32 %v906, 7
        %v908 = vsub.s32 0, %v907
        %v909 = vrot.slane %v423, %v908
        %915 = vrot.lane.b32.xlu0 %v901, 124
        %v916 = vpop.permute.xlu0 %915
        %917 = vrot.lane.b32.xlu0 %v902, 124
        %v918 = vpop.permute.xlu0 %917
        %919 = vrot.lane.b32.xlu0 %v903, 124
        %v920 = vpop.permute.xlu0 %919
        %921 = vrot.lane.b32.xlu0 %v904, 124
        %v922 = vpop.permute.xlu0 %921
        %vm923 = vcmask 1014784
        %v924 = vsel %vm923, %v916, %v918
        %v925 = vsel %vm923, %v920, %v922
        %928 = vxpose.xlu0.c.b16.start [1/8] %v924, 128
        %929 = vxpose.xlu0.c.b16.cont [2/8] %v925, 128
        %930 = vxpose.xlu0.c.b16.cont [3/8] 0, 128
        %931 = vxpose.xlu0.c.b16.cont [4/8] 0, 128
        %932 = vxpose.xlu0.c.b16.cont [5/8] 0, 128
        %933 = vxpose.xlu0.c.b16.cont [6/8] 0, 128
        %934 = vxpose.xlu0.c.b16.cont [7/8] 0, 128
        %935 = vxpose.xlu0.c.b16.end [8/8] 0, 128
        %v936 = vpop.trf.xlu0
        %v937 = vpop.trf.xlu0
        %v938 = vpop.trf.xlu0
        %v939 = vpop.trf.xlu0
        %v940 = vpop.trf.xlu0
        %v941 = vpop.trf.xlu0
        %v942 = vpop.trf.xlu0
        %v943 = vpop.trf.xlu0
        %v948 = vunpack.c.l.b16 %v419
        %v949 = vunpack.c.l.b16 %v420
        %v950 = vunpack.c.l.b16 %v421
        %v951 = vunpack.c.l.b16 %v422
        %v952 = vpack.c.b16 %v949, %v948
        %v953 = vpack.c.b16 %v951, %v950
        %vm956 = vcmask 261120
        %v958 = vsel %vm956, %v936, 0
        %v961 = vsel %vm956, %v937, 0
        %v964 = vsel %vm956, %v938, 0
        %v967 = vsel %vm956, %v939, 0
        %v970 = vsel %vm956, %v940, 0
        %v973 = vsel %vm956, %v941, 0
        %v976 = vsel %vm956, %v942, 0
        %v979 = vsel %vm956, %v943, 0
        %981 = vmatprep.subr.bf16.mxu0 0
        %982 = vmatpush1.bf16.msra.mxu0 %v952
        %983 = vmatprep.subr.bf16.mxu0 0
        %984 = vmatpush1.bf16.msra.mxu0 %v953
        %985 = vmatprep.subr.bf16.mxu0 0
        %986 = vmatpush1.bf16.msra.mxu0 0
        %987 = vmatprep.subr.bf16.mxu0 0
        %988 = vmatpush1.bf16.msra.mxu0 0
        %989 = vmatprep.subr.bf16.mxu0 0
        %990 = vmatpush1.bf16.msra.mxu0 0
        %991 = vmatprep.subr.bf16.mxu0 0
        %992 = vmatpush1.bf16.msra.mxu0 0
        %993 = vmatprep.subr.bf16.mxu0 0
        %994 = vmatpush1.bf16.msra.mxu0 0
        %995 = vmatprep.subr.bf16.mxu0 0
        %996 = vmatpush1.bf16.msra.mxu0 0
        %997 = vmatprep.subr.bf16.mxu0 0
        %998 = vmatpush1.bf16.msra.mxu0 0
        %999 = vmatprep.subr.bf16.mxu0 0
        %1000 = vmatpush1.bf16.msra.mxu0 0
        %1001 = vmatprep.subr.bf16.mxu0 0
        %1002 = vmatpush1.bf16.msra.mxu0 0
        %1003 = vmatprep.subr.bf16.mxu0 0
        %1004 = vmatpush1.bf16.msra.mxu0 0
        %1005 = vmatprep.subr.bf16.mxu0 0
        %1006 = vmatpush1.bf16.msra.mxu0 0
        %1007 = vmatprep.subr.bf16.mxu0 0
        %1008 = vmatpush1.bf16.msra.mxu0 0
        %1009 = vmatprep.subr.bf16.mxu0 0
        %1010 = vmatpush1.bf16.msra.mxu0 0
        %1011 = vmatprep.subr.bf16.mxu0 0
        %1012 = vmatpush1.bf16.msra.mxu0 0
        %1013 = vmatprep.mubr.bf16.mxu0 0
        %1014 = vmatmul.mubr.bf16.gmra.mrb[0].mxu0 %v958
        %v1015 = vpop.f32.mrb[0].mxu0
        %v1016 = vadd.f32 %v909, %v1015
        %v1017 = vpop.f32.mrb[0].mxu0
        %v1018 = vpop.f32.mrb[0].mxu0
        %v1019 = vadd.f32 %v909, %v1018
        %v1020 = vpop.f32.mrb[0].mxu0
        %1021 = vmatprep.mubr.bf16.mxu0 0
        %1022 = vmatmul.mubr.bf16.gmra.mrb[0].mxu0 %v961
        %v1023 = vpop.f32.mrb[0].mxu0
        %v1024 = vadd.f32 %v909, %v1023
        %v1025 = vpop.f32.mrb[0].mxu0
        %v1026 = vpop.f32.mrb[0].mxu0
        %v1027 = vadd.f32 %v909, %v1026
        %v1028 = vpop.f32.mrb[0].mxu0
        %1029 = vmatprep.mubr.bf16.mxu0 0
        %1030 = vmatmul.mubr.bf16.gmra.mrb[0].mxu0 %v964
        %v1031 = vpop.f32.mrb[0].mxu0
        %v1032 = vadd.f32 %v909, %v1031
        %v1033 = vpop.f32.mrb[0].mxu0
        %v1034 = vpop.f32.mrb[0].mxu0
        %v1035 = vadd.f32 %v909, %v1034
        %v1036 = vpop.f32.mrb[0].mxu0
        %1037 = vmatprep.mubr.bf16.mxu0 0
        %1038 = vmatmul.mubr.bf16.gmra.mrb[0].mxu0 %v967
        %v1039 = vpop.f32.mrb[0].mxu0
        %v1040 = vadd.f32 %v909, %v1039
        %v1041 = vpop.f32.mrb[0].mxu0
        %v1042 = vpop.f32.mrb[0].mxu0
        %v1043 = vadd.f32 %v909, %v1042
        %v1044 = vpop.f32.mrb[0].mxu0
        %1045 = vmatprep.mubr.bf16.mxu0 0
        %1046 = vmatmul.mubr.bf16.gmra.mrb[0].mxu0 %v970
        %v1047 = vpop.f32.mrb[0].mxu0
        %v1048 = vadd.f32 %v909, %v1047
        %v1049 = vpop.f32.mrb[0].mxu0
        %v1050 = vpop.f32.mrb[0].mxu0
        %v1051 = vadd.f32 %v909, %v1050
        %v1052 = vpop.f32.mrb[0].mxu0
        %1053 = vmatprep.mubr.bf16.mxu0 0
        %1054 = vmatmul.mubr.bf16.gmra.mrb[0].mxu0 %v973
        %v1055 = vpop.f32.mrb[0].mxu0
        %v1056 = vadd.f32 %v909, %v1055
        %v1057 = vpop.f32.mrb[0].mxu0
        %v1058 = vpop.f32.mrb[0].mxu0
        %v1059 = vadd.f32 %v909, %v1058
        %v1060 = vpop.f32.mrb[0].mxu0
        %1061 = vmatprep.mubr.bf16.mxu0 0
        %1062 = vmatmul.mubr.bf16.gmra.mrb[0].mxu0 %v976
        %v1063 = vpop.f32.mrb[0].mxu0
        %v1064 = vadd.f32 %v909, %v1063
        %v1065 = vpop.f32.mrb[0].mxu0
        %v1066 = vpop.f32.mrb[0].mxu0
        %v1067 = vadd.f32 %v909, %v1066
        %v1068 = vpop.f32.mrb[0].mxu0
        %1069 = vmatprep.mubr.bf16.mxu0 0
        %1070 = vmatmul.mubr.bf16.gmra.mrb[0].mxu0 %v979
        %v1071 = vpop.f32.mrb[0].mxu0
        %v1072 = vadd.f32 %v909, %v1071
        %v1073 = vpop.f32.mrb[0].mxu0
        %v1074 = vpop.f32.mrb[0].mxu0
        %v1075 = vadd.f32 %v909, %v1074
        %v1076 = vpop.f32.mrb[0].mxu0
        %1077 = vdwg.mxu0
        %v1078 = vmax.f32 %v1016, 0.0
        %v1079 = vmax.f32 %v1019, 0.0
        %v1080 = vmax.f32 %v1024, 0.0
        %v1081 = vmax.f32 %v1027, 0.0
        %v1082 = vmax.f32 %v1032, 0.0
        %v1083 = vmax.f32 %v1035, 0.0
        %v1084 = vmax.f32 %v1040, 0.0
        %v1085 = vmax.f32 %v1043, 0.0
        %v1086 = vmax.f32 %v1048, 0.0
        %v1087 = vmax.f32 %v1051, 0.0
        %v1088 = vmax.f32 %v1056, 0.0
        %v1089 = vmax.f32 %v1059, 0.0
        %v1090 = vmax.f32 %v1064, 0.0
        %v1091 = vmax.f32 %v1067, 0.0
        %v1092 = vmax.f32 %v1072, 0.0
        %v1093 = vmax.f32 %v1075, 0.0
        %vm1094 = vcmask 326656
        %1095 = vst.msk [vmem:[%s354] sm:$0xff] %vm1094, %v1078
        %1096 = vst.msk [vmem:[%s354 + $0x8] sm:$0xff] %vm1094, %v1079
        %1097 = vst.msk [vmem:[%s354 + $0x10] sm:$0xff] %vm1094, %v1080
        %1098 = vst.msk [vmem:[%s354 + $0x18] sm:$0xff] %vm1094, %v1081
        %1099 = vst.msk [vmem:[%s354 + $0x20] sm:$0xff] %vm1094, %v1082
        %1100 = vst.msk [vmem:[%s354 + $0x28] sm:$0xff] %vm1094, %v1083
        %1101 = vst.msk [vmem:[%s354 + $0x30] sm:$0xff] %vm1094, %v1084
        %1102 = vst.msk [vmem:[%s354 + $0x38] sm:$0xff] %vm1094, %v1085
        %1103 = vst.msk [vmem:[%s354 + $0x40] sm:$0xff] %vm1094, %v1086
        %1104 = vst.msk [vmem:[%s354 + $0x48] sm:$0xff] %vm1094, %v1087
        %1105 = vst.msk [vmem:[%s354 + $0x50] sm:$0xff] %vm1094, %v1088
        %1106 = vst.msk [vmem:[%s354 + $0x58] sm:$0xff] %vm1094, %v1089
        %1107 = vst.msk [vmem:[%s354 + $0x60] sm:$0xff] %vm1094, %v1090
        %1108 = vst.msk [vmem:[%s354 + $0x68] sm:$0xff] %vm1094, %v1091
        %1109 = vst.msk [vmem:[%s354 + $0x70] sm:$0xff] %vm1094, %v1092
        %1110 = vst.msk [vmem:[%s354 + $0x78] sm:$0xff] %vm1094, %v1093
        %s1111 = smul.u32 16, %s28
        %p1112 = scmp.lt.s32.totalorder %s27, 1
        %s1113 = scalar_select %p1112, %s27, 1
        %p1114 = scmp.lt.s32.totalorder %s1111, 31
        %s1115 = scalar_select %p1114, %s1111, 31
        %s1116 = smul.addr %s1113, 32
        %s1117 = sadd.s32 %s1115, %s1116
        %s1118 = smul.addr %s1117, 8
        %s1119 = scalar_lea.vmem %s7, %s1118
        %s1120 = sand.u32 %s227, 1
        %s1121 = scalar_lea.sflag [#allocation3], %s1120
        %s1122 = sand.u32 %s227, 1
        %s1123 = smul.addr %s1122, 32
        %s1124 = scalar_lea.vmem [#allocation2], %s1123
        // Predicated region
        $region49: #{tpu_custom_call.1} parent=47 // pred_check
          %p1125 = pneg %p209
        $region50: #{tpu_custom_call.1} parent=47 // pred_check_branch
          %1127 = sbr.rel (%p1125) target = $region52
        $region51: #{tpu_custom_call.1} parent=47 // pred_region
          %s1128 = smul.u32 16, %s28
        $region52: #{tpu_custom_call.1} parent=47 // pred_fallthru
          _
        // Predicated region
        $region53: #{tpu_custom_call.1} parent=47 // pred_check
          %p1129 = pneg %p237
        $region54: #{tpu_custom_call.1} parent=47 // pred_check_branch
          %1131 = sbr.rel (%p1129) target = $region56
        $region55: #{tpu_custom_call.1} parent=47 // pred_region
          %s1133 = ssub.s32 512, 512
          %1134 = vsyncadd %s1121, %s1133
          %s1135 = smul.addr %s27, 8
          %s1136 = sadd.s32 %s28, %s1135
          %s1137 = smul.addr %s1136, 128
          %s1138 = scalar_lea.hbm %s8, %s1137
          %s1139 = sshll.u32 %s1124, 4
          %s1140 = int_to_ptr.vmem [resolvable:$true] %s1139
          %1145 = dma.vmem_to_hbm [thread:$0]  %s1140, 512, %s1138, %s1121, 128, 256, 8
        $region56: #{tpu_custom_call.1} parent=47 // pred_fallthru
          _
      $region48: #{tpu_custom_call.1} parent=5 // pred_fallthru
        _
      %p1146 = scmp.le.s32.totalorder 2, %s18
      // Predicated region
      $region57: #{tpu_custom_call.1} parent=5 // pred_check
        %p1147 = pneg %p1146
      $region58: #{tpu_custom_call.1} parent=5 // pred_check_branch
        %1149 = sbr.rel (%p1147) target = $region60
      $region59: #{tpu_custom_call.1} parent=5 // pred_region
        %s1150 = ssub.s32 %s18, 2
        // Predicated region
        $region61: #{tpu_custom_call.1} parent=59 // pred_check
          %p1151 = pneg %p215
        $region62: #{tpu_custom_call.1} parent=59 // pred_check_branch
          %1153 = sbr.rel (%p1151) target = $region64
        $region63: #{tpu_custom_call.1} parent=59 // pred_region
          %s1154 = smul.u32 16, %s30
          %p1155 = scmp.lt.s32.totalorder %s29, 1
          %s1156 = scalar_select %p1155, %s29, 1
          %p1157 = scmp.lt.s32.totalorder %s1154, 31
          %s1158 = scalar_select %p1157, %s1154, 31
          %s1159 = smul.addr %s1156, 32
          %s1160 = sadd.s32 %s1158, %s1159
          %s1161 = smul.addr %s1160, 8
          %s1162 = scalar_lea.vmem %s7, %s1161
        $region64: #{tpu_custom_call.1} parent=59 // pred_fallthru
          _
        // Predicated region
        $region65: #{tpu_custom_call.1} parent=59 // pred_check
          %p1163 = pneg %p243
        $region66: #{tpu_custom_call.1} parent=59 // pred_check_branch
          %1165 = sbr.rel (%p1163) target = $region68
        $region67: #{tpu_custom_call.1} parent=59 // pred_region
          %s1166 = sand.u32 %s228, 1
          %s1167 = scalar_lea.sflag [#allocation3], %s1166
          %s1168 = sand.u32 %s228, 1
          %s1169 = smul.addr %s1168, 32
          %s1170 = scalar_lea.vmem [#allocation2], %s1169
          %1171 = dma.done %s1167, 512
        $region68: #{tpu_custom_call.1} parent=59 // pred_fallthru
          _
      $region60: #{tpu_custom_call.1} parent=5 // pred_fallthru
        _
    $region6: #{tpu_custom_call.1} parent=1 // loop_footer
      %s22 = sadd.s32 1, %s18
    $region7: #{tpu_custom_call.1} parent=1 // loop_footer_branch
      %17 = sbr.rel target = $region3
    $region8: #{tpu_custom_call.1} parent=1 // loop_exit
      _
    %1172 = vsyncpa [#allocation3], 1
    %s1173 = scalar_lea.sflag [#allocation3], 1
    %1174 = vsyncpa %s1173, 1

</llo_original>
